<compile_context>
chip_gen: v5e
topology: v5e:2x2
jax: 0.10.0
libtpu: 0.0.40
codegen_flags: <defaults>
</compile_context>

<pallas_src>
import functools

import jax
import jax.numpy as jnp
import numpy as np
from jax.experimental import pallas as pl
from jax.experimental.pallas import tpu as pltpu


def textcnn_kernel(max_fs, seq_len,
                   emb_ref, w_taps_ref, biasmask_ref, fc_w_ref, fc_b_ref, out_ref):
    """One grid step = one batch tile.

    emb_ref      : [Bt, S, E]         bf16  embedded tokens
    w_taps_ref   : [max_fs, E, NPAD]  bf16  tap-k conv weights at each filter's base columns
    biasmask_ref : [1, S, NPAD]       f32   conv bias at (valid t, base col), -1e30 elsewhere
    fc_w_ref     : [NPAD, CPAD]       bf16  fc weight scattered onto base columns, 0 elsewhere
    fc_b_ref     : [1, CPAD]          f32
    out_ref      : [Bt, CPAD]         f32   lane-dense padded logits
    """
    emb = emb_ref[...]

    def tap_product(k):
        return jax.lax.dot_general(
            emb, w_taps_ref[k],
            dimension_numbers=(((2,), (0,)), ((), ())),
            preferred_element_type=jnp.float32)            # [Bt, S, NPAD] f32

    # acc[b, t, base+f] = sum_k emb[b, t+k, :] @ W_k[:, base+f]
    # (pltpu.roll is circular: rows that wrap past S-fs are killed by biasmask below.)
    acc = tap_product(0)
    for k in range(1, max_fs):
        acc = acc + pltpu.roll(tap_product(k), shift=(seq_len - k) % seq_len, axis=1)

    # ReLU(conv + bias) with time-validity / column masking folded into one additive table.
    z = jnp.maximum(acc + biasmask_ref[...], 0.0)          # [Bt, S, NPAD]

    # Max-pool over time, then lane-dense padded FC (dropout is identity at inference).
    pooled = jnp.max(z, axis=1)                            # [Bt, NPAD]
    logits = jnp.dot(pooled.astype(fc_w_ref.dtype), fc_w_ref[...],
                     preferred_element_type=jnp.float32) + fc_b_ref[...]
    out_ref[...] = logits


def fold_textcnn_params(emb_table, conv_ws, conv_bs, fc_w, fc_b, filter_sizes, seq_len):
    """One-time host-side (numpy) folding of all weights into lane-dense kernel operands.

    Hoisted out of the per-call forward path so no .at[].set() chains are re-emitted
    on every inference call.
    """
    filter_sizes = tuple(int(fs) for fs in filter_sizes)
    n = len(filter_sizes)
    max_fs = max(filter_sizes)
    S = int(seq_len)
    assert all(1 <= fs <= S for fs in filter_sizes)

    emb_np = np.asarray(emb_table, np.float32)
    E = emb_np.shape[1]
    F = np.asarray(conv_ws[0]).shape[2]
    C = np.asarray(fc_w).shape[1]

    n_pad = ((n * F + 127) // 128) * 128                   # lane-dense fused-conv width
    c_pad = ((C + 127) // 128) * 128                       # lane-dense logits width

    w_taps = np.zeros((max_fs, E, n_pad), np.float32)
    biasmask = np.full((1, S, n_pad), -1e30, np.float32)
    fc_w_pad = np.zeros((n_pad, c_pad), np.float32)
    fc_b_pad = np.zeros((1, c_pad), np.float32)
    fc_b_pad[0, :C] = np.asarray(fc_b, np.float32).reshape(-1)

    for i, fs in enumerate(filter_sizes):
        col = i * F                                        # base columns of filter i
        w_i = np.asarray(conv_ws[i], np.float32)           # [fs, E, F]
        for k in range(fs):
            w_taps[k, :, col:col + F] = w_i[k]
        t_valid = S - fs + 1                               # valid conv output time steps
        biasmask[0, :t_valid, col:col + F] = np.asarray(conv_bs[i], np.float32).reshape(1, F)
        fc_w_pad[col:col + F, :C] = np.asarray(fc_w, np.float32)[i * F:(i + 1) * F, :]

    return dict(
        emb_table=jnp.asarray(emb_np, jnp.bfloat16),       # bf16 BEFORE the gather
        w_taps=jnp.asarray(w_taps, jnp.bfloat16),
        biasmask=jnp.asarray(biasmask),
        fc_w=jnp.asarray(fc_w_pad, jnp.bfloat16),
        fc_b=jnp.asarray(fc_b_pad),
        filter_sizes=filter_sizes, max_fs=max_fs, seq_len=S,
        emb_dim=E, n_pad=n_pad, c_pad=c_pad, num_classes=C)


def textcnn_forward(tokens, folded):
    B, S = tokens.shape
    assert S == folded["seq_len"]
    E, n_pad, c_pad = folded["emb_dim"], folded["n_pad"], folded["c_pad"]
    max_fs = folded["max_fs"]

    # Embedding gather stays in plain JAX, directly on the bf16 table (half the activation
    # HBM traffic vs gather-then-cast).
    # TODO(synk): in-kernel DMA gather only pays off at much larger vocab/seq.
    emb = jnp.take(folded["emb_table"], tokens, axis=0)    # [B, S, E] bf16

    # ---- batch tiling -----------------------------------------------------------------
    # Per-tile footprint = a few [Bt, S, n_pad] f32 temps + bf16 emb double-buffer; cap the
    # tile so ~10 such temps stay under ~24 MiB, default to 256 rows to amortize the ~0.35us
    # per-grid-step overhead, and keep >=2 grid steps for larger batches so v7x's two
    # TensorCores both get work (v5e/v6e are single-TC, so this costs them nothing).
    if B <= 16:
        b_tile = B                                         # one tiny tile (block == full dim)
    else:
        vmem_cap_rows = max(8, (24 * 1024 * 1024) // (10 * S * n_pad * 4) // 8 * 8)
        half_batch = ((B + 1) // 2 + 7) // 8 * 8
        b_tile = min(256, vmem_cap_rows, half_batch)
    b_padded = ((B + b_tile - 1) // b_tile) * b_tile
    if b_padded != B:
        emb = jnp.pad(emb, ((0, b_padded - B), (0, 0), (0, 0)))

    per_tile_f32 = b_tile * S * n_pad * 4
    weights_bytes = (max_fs * E * n_pad + n_pad * c_pad) * 2 + (S + 1) * n_pad * 4
    vmem_limit = int(min(max(
        10 * per_tile_f32                  # in-kernel f32 temps (acc / per-tap products / z)
        + 2 * b_tile * S * E * 2           # double-buffered bf16 emb tile
        + 2 * b_tile * c_pad * 4           # double-buffered f32 logits tile
        + weights_bytes
        + (2 << 20),                       # headroom
        16 << 20), 32 << 20))

    kernel = functools.partial(textcnn_kernel, max_fs, S)

    out = pl.pallas_call(
        kernel,
        out_shape=jax.ShapeDtypeStruct((b_padded, c_pad), jnp.float32),
        grid=(b_padded // b_tile,),
        in_specs=[
            pl.BlockSpec((b_tile, S, E), lambda b: (b, 0, 0)),        # pipelined activations
            pl.BlockSpec((max_fs, E, n_pad), lambda b: (0, 0, 0)),    # VMEM-resident weights
            pl.BlockSpec((1, S, n_pad), lambda b: (0, 0, 0)),
            pl.BlockSpec((n_pad, c_pad), lambda b: (0, 0)),
            pl.BlockSpec((1, c_pad), lambda b: (0, 0)),
        ],
        out_specs=pl.BlockSpec((b_tile, c_pad), lambda b: (b, 0)),
        compiler_params=pltpu.CompilerParams(
            dimension_semantics=("parallel",),             # megacore / v7x 2-TC sharding
            vmem_limit_bytes=vmem_limit),
    )(emb, folded["w_taps"], folded["biasmask"], folded["fc_w"], folded["fc_b"])

    return out[:B, :folded["num_classes"]]


def textcnn_reference(tokens, emb_table, conv_ws, conv_bs, fc_w, fc_b, filter_sizes):
    """Pure-JAX reference with the exact PyTorch TextCNN forward semantics."""
    emb = jnp.take(emb_table, tokens, axis=0)              # [B, S, E]
    S = emb.shape[1]
    pooled = []
    for i, fs in enumerate(filter_sizes):
        w = conv_ws[i]                                     # [fs, E, F]
        t_out = S - fs + 1
        acc = jnp.zeros((emb.shape[0], t_out, w.shape[2]), jnp.float32)
        for k in range(fs):
            acc = acc + jnp.einsum("bte,ef->btf", emb[:, k:k + t_out, :], w[k],
                                   precision=jax.lax.Precision.HIGHEST)
        conved = jnp.maximum(acc + conv_bs[i][None], 0.0)
        pooled.append(jnp.max(conved, axis=1))
    cat = jnp.concatenate(pooled, axis=1)
    return jnp.dot(cat, fc_w, precision=jax.lax.Precision.HIGHEST) + fc_b


if __name__ == "__main__":
    vocab_size = 50
    embedding_dim = 32
    num_filters = 8
    filter_sizes = (3, 4, 5)
    num_classes = 4
    padding_idx = 0
    batch = 2
    seq_len = 16

    key = jax.random.PRNGKey(0)
    k_tok, k_emb, k_fc_w, k_fc_b, *k_convs = jax.random.split(key, 4 + len(filter_sizes))

    tokens = jax.random.randint(k_tok, (batch, seq_len), 0, vocab_size, dtype=jnp.int32)

    emb_table = 0.1 * jax.random.normal(k_emb, (vocab_size, embedding_dim), jnp.float32)
    emb_table = emb_table.at[padding_idx].set(0.0)         # nn.Embedding(padding_idx=0)

    # Conv1d params: PyTorch weight [F, E, fs] is stored here as [fs, E, F].
    conv_ws, conv_bs = [], []
    for i, fs in enumerate(filter_sizes):
        kw, kb = jax.random.split(k_convs[i])
        conv_ws.append(0.1 * jax.random.normal(kw, (fs, embedding_dim, num_filters), jnp.float32))
        conv_bs.append(0.1 * jax.random.normal(kb, (1, num_filters), jnp.float32))

    # Linear params: PyTorch weight [C, F*n] passed pre-transposed as [F*n, C].
    fc_in = num_filters * len(filter_sizes)
    fc_w = 0.1 * jax.random.normal(k_fc_w, (fc_in, num_classes), jnp.float32)
    fc_b = 0.1 * jax.random.normal(k_fc_b, (1, num_classes), jnp.float32)

    # One-time host-side weight folding (hoisted out of the per-call forward path).
    folded = fold_textcnn_params(emb_table, conv_ws, conv_bs, fc_w, fc_b,
                                 filter_sizes, seq_len)

    logits = textcnn_forward(tokens, folded)
    logits = jax.block_until_ready(logits)
    assert logits.shape == (batch, num_classes)

    # Correctness check against the pure-JAX reference, run on bf16-rounded weights (the
    # kernel intentionally runs the conv and fc matmuls in bf16 with f32 accumulation).
    q = lambda a: a.astype(jnp.bfloat16).astype(jnp.float32)
    ref = textcnn_reference(tokens, q(emb_table), [q(w) for w in conv_ws],
                            conv_bs, q(fc_w), fc_b, filter_sizes)
    assert jnp.allclose(logits, ref, atol=1e-2, rtol=5e-2), (logits, ref)
    print("KERNEL_OK")
</pallas_src>

<mosaic_0001>
module attributes {stable_mosaic.version = 11 : i64} {
  func.func @textcnn_kernel(%arg0: i32, %arg1: memref<2x16x32xbf16, #tpu.memory_space<vmem>>, %arg2: memref<5x32x128xbf16, #tpu.memory_space<vmem>>, %arg3: memref<1x16x128xf32, #tpu.memory_space<vmem>>, %arg4: memref<128x128xbf16, #tpu.memory_space<vmem>>, %arg5: memref<1x128xf32, #tpu.memory_space<vmem>>, %arg6: memref<2x128xf32, #tpu.memory_space<vmem>>) attributes {dimension_semantics = [#tpu.dimension_semantics<parallel>], iteration_bounds = array<i64: 1>, scalar_prefetch = 0 : i64, scratch_operands = 0 : i64, tpu.core_type = #tpu.core_type<tc>, window_params = [{transform_indices = @transform_0, window_bounds = array<i64: 2, 16, 32>}, {pipeline_mode = #tpu.pipeline_mode<synchronous>, transform_indices = @transform_1, window_bounds = array<i64: 5, 32, 128>}, {pipeline_mode = #tpu.pipeline_mode<synchronous>, transform_indices = @transform_2, window_bounds = array<i64: 1, 16, 128>}, {pipeline_mode = #tpu.pipeline_mode<synchronous>, transform_indices = @transform_3, window_bounds = array<i64: 128, 128>}, {pipeline_mode = #tpu.pipeline_mode<synchronous>, transform_indices = @transform_4, window_bounds = array<i64: 1, 128>}, {transform_indices = @transform_5, window_bounds = array<i64: 2, 128>}]} {
    %c0 = arith.constant 0 : index
    %c0_0 = arith.constant 0 : index
    %c0_1 = arith.constant 0 : index
    %0 = vector.load %arg1[%c0, %c0_0, %c0_1] : memref<2x16x32xbf16, #tpu.memory_space<vmem>>, vector<2x16x32xbf16>
    %c0_2 = arith.constant 0 : index
    %c0_3 = arith.constant 0 : index
    %c0_4 = arith.constant 0 : index
    %1 = vector.load %arg2[%c0_2, %c0_3, %c0_4] : memref<5x32x128xbf16, #tpu.memory_space<vmem>>, vector<1x32x128xbf16>
    %2 = vector.shape_cast %1 : vector<1x32x128xbf16> to vector<32x128xbf16>
    %cst = arith.constant dense<0.000000e+00> : vector<2x16x128xf32>
    %3 = tpu.matmul %0, %2, %cst {dimension_numbers = #tpu.dot_dimension_numbers<[2], [0], [0, 1], [1], [0, 0, 0, 1, 1, 1], [], []>} : vector<2x16x32xbf16>, vector<32x128xbf16>, vector<2x16x128xf32> -> vector<2x16x128xf32>
    %c1 = arith.constant 1 : index
    %c0_5 = arith.constant 0 : index
    %c0_6 = arith.constant 0 : index
    %4 = vector.load %arg2[%c1, %c0_5, %c0_6] : memref<5x32x128xbf16, #tpu.memory_space<vmem>>, vector<1x32x128xbf16>
    %5 = vector.shape_cast %4 : vector<1x32x128xbf16> to vector<32x128xbf16>
    %cst_7 = arith.constant dense<0.000000e+00> : vector<2x16x128xf32>
    %6 = tpu.matmul %0, %5, %cst_7 {dimension_numbers = #tpu.dot_dimension_numbers<[2], [0], [0, 1], [1], [0, 0, 0, 1, 1, 1], [], []>} : vector<2x16x32xbf16>, vector<32x128xbf16>, vector<2x16x128xf32> -> vector<2x16x128xf32>
    %c15_i32 = arith.constant 15 : i32
    %7 = tpu.dynamic_rotate %6 by %c15_i32 dim 1 : vector<2x16x128xf32>, i32 -> vector<2x16x128xf32>
    %8 = arith.addf %3, %7 : vector<2x16x128xf32>
    %c2 = arith.constant 2 : index
    %c0_8 = arith.constant 0 : index
    %c0_9 = arith.constant 0 : index
    %9 = vector.load %arg2[%c2, %c0_8, %c0_9] : memref<5x32x128xbf16, #tpu.memory_space<vmem>>, vector<1x32x128xbf16>
    %10 = vector.shape_cast %9 : vector<1x32x128xbf16> to vector<32x128xbf16>
    %cst_10 = arith.constant dense<0.000000e+00> : vector<2x16x128xf32>
    %11 = tpu.matmul %0, %10, %cst_10 {dimension_numbers = #tpu.dot_dimension_numbers<[2], [0], [0, 1], [1], [0, 0, 0, 1, 1, 1], [], []>} : vector<2x16x32xbf16>, vector<32x128xbf16>, vector<2x16x128xf32> -> vector<2x16x128xf32>
    %c14_i32 = arith.constant 14 : i32
    %12 = tpu.dynamic_rotate %11 by %c14_i32 dim 1 : vector<2x16x128xf32>, i32 -> vector<2x16x128xf32>
    %13 = arith.addf %8, %12 : vector<2x16x128xf32>
    %c3 = arith.constant 3 : index
    %c0_11 = arith.constant 0 : index
    %c0_12 = arith.constant 0 : index
    %14 = vector.load %arg2[%c3, %c0_11, %c0_12] : memref<5x32x128xbf16, #tpu.memory_space<vmem>>, vector<1x32x128xbf16>
    %15 = vector.shape_cast %14 : vector<1x32x128xbf16> to vector<32x128xbf16>
    %cst_13 = arith.constant dense<0.000000e+00> : vector<2x16x128xf32>
    %16 = tpu.matmul %0, %15, %cst_13 {dimension_numbers = #tpu.dot_dimension_numbers<[2], [0], [0, 1], [1], [0, 0, 0, 1, 1, 1], [], []>} : vector<2x16x32xbf16>, vector<32x128xbf16>, vector<2x16x128xf32> -> vector<2x16x128xf32>
    %c13_i32 = arith.constant 13 : i32
    %17 = tpu.dynamic_rotate %16 by %c13_i32 dim 1 : vector<2x16x128xf32>, i32 -> vector<2x16x128xf32>
    %18 = arith.addf %13, %17 : vector<2x16x128xf32>
    %c4 = arith.constant 4 : index
    %c0_14 = arith.constant 0 : index
    %c0_15 = arith.constant 0 : index
    %19 = vector.load %arg2[%c4, %c0_14, %c0_15] : memref<5x32x128xbf16, #tpu.memory_space<vmem>>, vector<1x32x128xbf16>
    %20 = vector.shape_cast %19 : vector<1x32x128xbf16> to vector<32x128xbf16>
    %cst_16 = arith.constant dense<0.000000e+00> : vector<2x16x128xf32>
    %21 = tpu.matmul %0, %20, %cst_16 {dimension_numbers = #tpu.dot_dimension_numbers<[2], [0], [0, 1], [1], [0, 0, 0, 1, 1, 1], [], []>} : vector<2x16x32xbf16>, vector<32x128xbf16>, vector<2x16x128xf32> -> vector<2x16x128xf32>
    %c12_i32 = arith.constant 12 : i32
    %22 = tpu.dynamic_rotate %21 by %c12_i32 dim 1 : vector<2x16x128xf32>, i32 -> vector<2x16x128xf32>
    %23 = arith.addf %18, %22 : vector<2x16x128xf32>
    %c0_17 = arith.constant 0 : index
    %c0_18 = arith.constant 0 : index
    %c0_19 = arith.constant 0 : index
    %24 = vector.load %arg3[%c0_17, %c0_18, %c0_19] : memref<1x16x128xf32, #tpu.memory_space<vmem>>, vector<1x16x128xf32>
    %25 = vector.broadcast %24 : vector<1x16x128xf32> to vector<2x16x128xf32>
    %26 = arith.addf %23, %25 : vector<2x16x128xf32>
    %cst_20 = arith.constant 0.000000e+00 : f32
    %27 = vector.broadcast %cst_20 : f32 to vector<2x16x128xf32>
    %28 = arith.maximumf %26, %27 : vector<2x16x128xf32>
    %cst_21 = arith.constant dense<0xFF800000> : vector<2x128xf32>
    %29 = vector.multi_reduction <maximumf>, %28, %cst_21 [1] : vector<2x16x128xf32> to vector<2x128xf32>
    %30 = arith.truncf %29 : vector<2x128xf32> to vector<2x128xbf16>
    %c0_22 = arith.constant 0 : index
    %c0_23 = arith.constant 0 : index
    %31 = vector.load %arg4[%c0_22, %c0_23] : memref<128x128xbf16, #tpu.memory_space<vmem>>, vector<128x128xbf16>
    %cst_24 = arith.constant dense<0.000000e+00> : vector<2x128xf32>
    %32 = tpu.matmul %30, %31, %cst_24 {dimension_numbers = #tpu.dot_dimension_numbers<[1], [0], [0], [1], [0, 0, 1, 1], [], []>} : vector<2x128xbf16>, vector<128x128xbf16>, vector<2x128xf32> -> vector<2x128xf32>
    %c0_25 = arith.constant 0 : index
    %c0_26 = arith.constant 0 : index
    %33 = vector.load %arg5[%c0_25, %c0_26] : memref<1x128xf32, #tpu.memory_space<vmem>>, vector<1x128xf32>
    %34 = vector.broadcast %33 : vector<1x128xf32> to vector<2x128xf32>
    %35 = arith.addf %32, %34 : vector<2x128xf32>
    %c0_27 = arith.constant 0 : index
    %c0_28 = arith.constant 0 : index
    %36 = vector.load %arg6[%c0_27, %c0_28] : memref<2x128xf32, #tpu.memory_space<vmem>>, vector<2x128xf32>
    tpu.vector_store %arg6[%c0_27, %c0_28], %35 {strides = array<i32>} : memref<2x128xf32, #tpu.memory_space<vmem>>, vector<2x128xf32>,
    return
  }
  func.func @transform_0(%arg0: i32) -> (i32, i32, i32) {
    %c0_i32 = arith.constant 0 : i32
    %c0_i32_0 = arith.constant 0 : i32
    %c0_i32_1 = arith.constant 0 : i32
    return %arg0, %c0_i32, %c0_i32_0 : i32, i32, i32
  }
  func.func @transform_1(%arg0: i32) -> (i32, i32, i32) {
    %c0_i32 = arith.constant 0 : i32
    %c0_i32_0 = arith.constant 0 : i32
    %c0_i32_1 = arith.constant 0 : i32
    %c0_i32_2 = arith.constant 0 : i32
    return %c0_i32, %c0_i32_0, %c0_i32_1 : i32, i32, i32
  }
  func.func @transform_2(%arg0: i32) -> (i32, i32, i32) {
    %c0_i32 = arith.constant 0 : i32
    %c0_i32_0 = arith.constant 0 : i32
    %c0_i32_1 = arith.constant 0 : i32
    %c0_i32_2 = arith.constant 0 : i32
    return %c0_i32, %c0_i32_0, %c0_i32_1 : i32, i32, i32
  }
  func.func @transform_3(%arg0: i32) -> (i32, i32) {
    %c0_i32 = arith.constant 0 : i32
    %c0_i32_0 = arith.constant 0 : i32
    %c0_i32_1 = arith.constant 0 : i32
    return %c0_i32, %c0_i32_0 : i32, i32
  }
  func.func @transform_4(%arg0: i32) -> (i32, i32) {
    %c0_i32 = arith.constant 0 : i32
    %c0_i32_0 = arith.constant 0 : i32
    %c0_i32_1 = arith.constant 0 : i32
    return %c0_i32, %c0_i32_0 : i32, i32
  }
  func.func @transform_5(%arg0: i32) -> (i32, i32) {
    %c0_i32 = arith.constant 0 : i32
    %c0_i32_0 = arith.constant 0 : i32
    return %arg0, %c0_i32 : i32, i32
  }
}

</mosaic_0001>

<llo_original>
// kernel: tpu_custom_call.1
$region0: #{tpu_custom_call.1}
  #allocation0 [shape = 'u32[]', space=smem, size = 0x4, offset = 0x4, fixed_abs, tag = 'smem constant byte address 0x4 - core index']
  #allocation1 [shape = 'u32[72,128]{1,0:T(1,128)}', space=vmem, size = 0x9000, scoped, tag = 'internal scratch']
  %s0 = inlined_call_operand.hbm [shape: bf16[2,16,32], index: 0, kind: input, shape index: {}]
  %s1 = inlined_call_operand.hbm [shape: bf16[5,32,128], index: 1, kind: input, shape index: {}]
  %s2 = inlined_call_operand.hbm [shape: f32[1,16,128], index: 2, kind: input, shape index: {}]
  %s3 = inlined_call_operand.hbm [shape: bf16[128,128], index: 3, kind: input, shape index: {}]
  %s4 = inlined_call_operand.vmem [shape: f32[1,128], index: 4, kind: input, shape index: {}]
  %s5 = inlined_call_operand.hbm [shape: f32[2,128], index: 5, kind: output, shape index: {}]
  %s6 = sld [smem:[#allocation0]]
  $region46: #{tpu_custom_call.1} parent=0
    _
  %s8 = ssub.s32 1, %s6
  %s9 = scalar_select 0, %s8, %s6
  $region1: #{tpu_custom_call.1} parent=0
    #allocation2 [shape = 'u8[8192]{0}', space=vmem, size = 0x2000, scoped, tag = 'input window, operand 0, single buffered']
    #allocation3 [shape = 's32[1]{0}', space=sflag, size = 0x4, scoped, tag = 'scoped memory for tpu_custom_call.1']
    #allocation4 [shape = 's32[1]{0}', space=sflag, size = 0x4, scoped, tag = 'scoped memory for tpu_custom_call.1']
    #allocation5 [shape = 'u8[40960]{0}', space=vmem, size = 0xa000, scoped, tag = 'input window, operand 1, single buffered']
    #allocation6 [shape = 's32[1]{0}', space=sflag, size = 0x4, scoped, tag = 'scoped memory for tpu_custom_call.1']
    #allocation7 [shape = 'u8[8192]{0}', space=vmem, size = 0x2000, scoped, tag = 'input window, operand 2, single buffered']
    #allocation8 [shape = 'u8[32768]{0}', space=vmem, size = 0x8000, scoped, tag = 'input window, operand 3, single buffered']
    #allocation9 [shape = 's32[1]{0}', space=sflag, size = 0x4, scoped, tag = 'scoped memory for tpu_custom_call.1']
    #allocation10 [shape = 'u8[1024]{0}', space=vmem, size = 0x400, scoped, tag = 'output window, operand 0, single buffered']
    %10 = vsyncpa [#allocation3], 0
    %11 = vsyncpa [#allocation6], 0
    %12 = vsyncpa [#allocation9], 0
    %13 = vsyncpa [#allocation4], 0
    // Predicated region
    $region2: #{tpu_custom_call.1} parent=1 // pred_check
      _
    $region3: #{tpu_custom_call.1} parent=1 // pred_check_branch
      %15 = sbr.rel (0) target = $region5
    $region4: #{tpu_custom_call.1} parent=1 // pred_region
      %17 = vsyncadd [#allocation3], 0
      %s18 = sshll.u32 %s0, 4
      %s19 = int_to_ptr.hbm [resolvable:$true] %s18
      %s20 = sshll.u32 [#allocation2], 4
      %s21 = int_to_ptr.vmem [resolvable:$true] %s20
      %26 = dma.hbm_to_vmem [thread:$0]  %s19, 256, %s21, [#allocation3], 64, 64, 4
    $region5: #{tpu_custom_call.1} parent=1 // pred_fallthru
      _
    // Predicated region
    $region6: #{tpu_custom_call.1} parent=1 // pred_check
      _
    $region7: #{tpu_custom_call.1} parent=1 // pred_check_branch
      %28 = sbr.rel (0) target = $region9
    $region8: #{tpu_custom_call.1} parent=1 // pred_region
      %30 = vsyncadd [#allocation6], 0
      %s31 = sshll.u32 %s1, 4
      %s32 = int_to_ptr.hbm [resolvable:$true] %s31
      %s33 = sshll.u32 [#allocation5], 4
      %s34 = int_to_ptr.vmem [resolvable:$true] %s33
      %39 = dma.hbm_to_vmem [thread:$0]  %s32, 1280, %s34, [#allocation6], 64, 64, 4
    $region9: #{tpu_custom_call.1} parent=1 // pred_fallthru
      _
    // Predicated region
    $region10: #{tpu_custom_call.1} parent=1 // pred_check
      _
    $region11: #{tpu_custom_call.1} parent=1 // pred_check_branch
      %41 = sbr.rel (0) target = $region13
    $region12: #{tpu_custom_call.1} parent=1 // pred_region
      %43 = vsyncadd [#allocation6], 0
      %s44 = sshll.u32 %s2, 4
      %s45 = int_to_ptr.hbm [resolvable:$true] %s44
      %s46 = sshll.u32 [#allocation7], 4
      %s47 = int_to_ptr.vmem [resolvable:$true] %s46
      %52 = dma.hbm_to_vmem [thread:$0]  %s45, 256, %s47, [#allocation6], 128, 128, 8
    $region13: #{tpu_custom_call.1} parent=1 // pred_fallthru
      _
    // Predicated region
    $region14: #{tpu_custom_call.1} parent=1 // pred_check
      _
    $region15: #{tpu_custom_call.1} parent=1 // pred_check_branch
      %54 = sbr.rel (0) target = $region17
    $region16: #{tpu_custom_call.1} parent=1 // pred_region
      %56 = vsyncadd [#allocation9], 0
      %s57 = sshll.u32 %s3, 4
      %s58 = int_to_ptr.hbm [resolvable:$true] %s57
      %s59 = sshll.u32 [#allocation8], 4
      %s60 = int_to_ptr.vmem [resolvable:$true] %s59
      %65 = dma.hbm_to_vmem [thread:$0]  %s58, 1024, %s60, [#allocation9], 64, 64, 4
    $region17: #{tpu_custom_call.1} parent=1 // pred_fallthru
      _
    // Predicated region
    $region18: #{tpu_custom_call.1} parent=1 // pred_check
      _
    $region19: #{tpu_custom_call.1} parent=1 // pred_check_branch
      %67 = sbr.rel (0) target = $region21
    $region20: #{tpu_custom_call.1} parent=1 // pred_region
      _
    $region21: #{tpu_custom_call.1} parent=1 // pred_fallthru
      _
    // Predicated region
    $region22: #{tpu_custom_call.1} parent=1 // pred_check
      _
    $region23: #{tpu_custom_call.1} parent=1 // pred_check_branch
      %69 = sbr.rel (0) target = $region25
    $region24: #{tpu_custom_call.1} parent=1 // pred_region
      %71 = dma.done [#allocation3], 256
    $region25: #{tpu_custom_call.1} parent=1 // pred_fallthru
      _
    // Predicated region
    $region26: #{tpu_custom_call.1} parent=1 // pred_check
      _
    $region27: #{tpu_custom_call.1} parent=1 // pred_check_branch
      %73 = sbr.rel (0) target = $region29
    $region28: #{tpu_custom_call.1} parent=1 // pred_region
      %75 = dma.done [#allocation6], 1280
    $region29: #{tpu_custom_call.1} parent=1 // pred_fallthru
      _
    // Predicated region
    $region30: #{tpu_custom_call.1} parent=1 // pred_check
      _
    $region31: #{tpu_custom_call.1} parent=1 // pred_check_branch
      %77 = sbr.rel (0) target = $region33
    $region32: #{tpu_custom_call.1} parent=1 // pred_region
      %79 = dma.done [#allocation6], 256
    $region33: #{tpu_custom_call.1} parent=1 // pred_fallthru
      _
    // Predicated region
    $region34: #{tpu_custom_call.1} parent=1 // pred_check
      _
    $region35: #{tpu_custom_call.1} parent=1 // pred_check_branch
      %81 = sbr.rel (0) target = $region37
    $region36: #{tpu_custom_call.1} parent=1 // pred_region
      %83 = dma.done [#allocation9], 1024
    $region37: #{tpu_custom_call.1} parent=1 // pred_fallthru
      _
    %v85 = vld [vmem:[#allocation2] sm:$0xf]
    %v86 = vld [vmem:[#allocation2 + $0x4] sm:$0xf]
    %v87 = vld [vmem:[#allocation2 + $0x8] sm:$0xf]
    %v88 = vld [vmem:[#allocation2 + $0xc] sm:$0xf]
    %v89 = vld [vmem:[#allocation5] sm:$0xf]
    %v90 = vld [vmem:[#allocation5 + $0x4] sm:$0xf]
    %v91 = vld [vmem:[#allocation5 + $0x8] sm:$0xf]
    %v92 = vld [vmem:[#allocation5 + $0xc] sm:$0xf]
    %s93 = scalar_lea.vmem [#allocation5], 16
    %v94 = vld [vmem:[%s93] sm:$0xf]
    %v95 = vld [vmem:[%s93 + $0x4] sm:$0xf]
    %v96 = vld [vmem:[%s93 + $0x8] sm:$0xf]
    %v97 = vld [vmem:[%s93 + $0xc] sm:$0xf]
    %v102 = vunpack.c.l.b16 %v85
    %v103 = vunpack.c.l.b16 %v86
    %v104 = vunpack.c.l.b16 %v87
    %v105 = vunpack.c.l.b16 %v88
    %v106 = vpack.c.b16 %v103, %v102
    %v107 = vpack.c.b16 %v105, %v104
    %v112 = vunpack.c.l.b16 %v94
    %v113 = vunpack.c.l.b16 %v95
    %v114 = vunpack.c.l.b16 %v96
    %v115 = vunpack.c.l.b16 %v97
    %v116 = vpack.c.b16 %v113, %v112
    %v117 = vpack.c.b16 %v115, %v114
    %vm120 = vcmask 261120
    %v122 = vsel %vm120, %v106, 0
    %v125 = vsel %vm120, %v107, 0
    %127 = vmatpush.bf16.msra.mxu0 0
    %128 = vmatpush.bf16.msra.mxu0 0
    %129 = vmatpush.bf16.msra.mxu0 0
    %130 = vmatpush.bf16.msra.mxu0 0
    %131 = vmatpush.bf16.msra.mxu0 0
    %132 = vmatpush.bf16.msra.mxu0 0
    %133 = vmatpush.bf16.msra.mxu0 %v117
    %134 = vmatpush.bf16.msra.mxu0 %v116
    %135 = vmatmul.bf16.gmra.mxu0 %v122
    %v136 = vpop.f32.mrf.mxu0
    %v137 = vadd.f32 0.0, %v136
    %v138 = vpop.f32.mrf.mxu0
    %v139 = vadd.f32 0.0, %v138
    %140 = vmatmul.bf16.gmra.mxu0 %v125
    %v141 = vpop.f32.mrf.mxu0
    %v142 = vadd.f32 0.0, %v141
    %v143 = vpop.f32.mrf.mxu0
    %v144 = vadd.f32 0.0, %v143
    %145 = vdwg.mxu0
    %v146 = vrot.slane %v137, 1
    %v147 = vrot.slane %v142, 1
    %v148 = vrot.slane %v139, 1
    %v149 = vrot.slane %v144, 1
    %v150 = vlaneseq
    %v151 = vshrl.u32 %v150, 7
    %vm152 = vcmp.lt.s32.totalorder %v151, 7
    %v153 = vsel %vm152, %v146, %v148
    %v154 = vsel %vm152, %v147, %v149
    %v155 = vsel %vm152, %v148, %v146
    %v156 = vsel %vm152, %v149, %v147
    %v161 = vunpack.c.l.b16 %v89
    %v162 = vunpack.c.l.b16 %v90
    %v163 = vunpack.c.l.b16 %v91
    %v164 = vunpack.c.l.b16 %v92
    %v165 = vpack.c.b16 %v162, %v161
    %v166 = vpack.c.b16 %v164, %v163
    %169 = vmatpush.bf16.msra.mxu0 0
    %170 = vmatpush.bf16.msra.mxu0 0
    %171 = vmatpush.bf16.msra.mxu0 0
    %172 = vmatpush.bf16.msra.mxu0 0
    %173 = vmatpush.bf16.msra.mxu0 0
    %174 = vmatpush.bf16.msra.mxu0 0
    %175 = vmatpush.bf16.msra.mxu0 %v166
    %176 = vmatpush.bf16.msra.mxu0 %v165
    %177 = vmatmul.bf16.gmra.mxu0 %v122
    %v178 = vpop.f32.mrf.mxu0
    %v179 = vadd.f32 %v153, %v178
    %v180 = vpop.f32.mrf.mxu0
    %v181 = vadd.f32 %v155, %v180
    %182 = vmatmul.bf16.gmra.mxu0 %v125
    %v183 = vpop.f32.mrf.mxu0
    %v184 = vadd.f32 %v154, %v183
    %v185 = vpop.f32.mrf.mxu0
    %v186 = vadd.f32 %v156, %v185
    %187 = vdwg.mxu0
    %s188 = scalar_lea.vmem [#allocation5], 32
    %v189 = vld [vmem:[%s188] sm:$0xf]
    %v190 = vld [vmem:[%s188 + $0x4] sm:$0xf]
    %v191 = vld [vmem:[%s188 + $0x8] sm:$0xf]
    %v192 = vld [vmem:[%s188 + $0xc] sm:$0xf]
    %v197 = vunpack.c.l.b16 %v189
    %v198 = vunpack.c.l.b16 %v190
    %v199 = vunpack.c.l.b16 %v191
    %v200 = vunpack.c.l.b16 %v192
    %v201 = vpack.c.b16 %v198, %v197
    %v202 = vpack.c.b16 %v200, %v199
    %205 = vmatpush.bf16.msra.mxu0 0
    %206 = vmatpush.bf16.msra.mxu0 0
    %207 = vmatpush.bf16.msra.mxu0 0
    %208 = vmatpush.bf16.msra.mxu0 0
    %209 = vmatpush.bf16.msra.mxu0 0
    %210 = vmatpush.bf16.msra.mxu0 0
    %211 = vmatpush.bf16.msra.mxu0 %v202
    %212 = vmatpush.bf16.msra.mxu0 %v201
    %213 = vmatmul.bf16.gmra.mxu0 %v122
    %v214 = vpop.f32.mrf.mxu0
    %v215 = vadd.f32 0.0, %v214
    %v216 = vpop.f32.mrf.mxu0
    %v217 = vadd.f32 0.0, %v216
    %218 = vmatmul.bf16.gmra.mxu0 %v125
    %v219 = vpop.f32.mrf.mxu0
    %v220 = vadd.f32 0.0, %v219
    %v221 = vpop.f32.mrf.mxu0
    %v222 = vadd.f32 0.0, %v221
    %223 = vdwg.mxu0
    %v224 = vrot.slane %v215, 2
    %v225 = vrot.slane %v220, 2
    %v226 = vrot.slane %v217, 2
    %v227 = vrot.slane %v222, 2
    %vm228 = vcmp.lt.s32.totalorder %v151, 6
    %v229 = vsel %vm228, %v224, %v226
    %v230 = vsel %vm228, %v225, %v227
    %v231 = vsel %vm228, %v226, %v224
    %v232 = vsel %vm228, %v227, %v225
    %v233 = vadd.f32 %v179, %v229
    %v234 = vadd.f32 %v181, %v231
    %v235 = vadd.f32 %v184, %v230
    %v236 = vadd.f32 %v186, %v232
    %s237 = scalar_lea.vmem [#allocation5], 48
    %v238 = vld [vmem:[%s237] sm:$0xf]
    %v239 = vld [vmem:[%s237 + $0x4] sm:$0xf]
    %v240 = vld [vmem:[%s237 + $0x8] sm:$0xf]
    %v241 = vld [vmem:[%s237 + $0xc] sm:$0xf]
    %v246 = vunpack.c.l.b16 %v238
    %v247 = vunpack.c.l.b16 %v239
    %v248 = vunpack.c.l.b16 %v240
    %v249 = vunpack.c.l.b16 %v241
    %v250 = vpack.c.b16 %v247, %v246
    %v251 = vpack.c.b16 %v249, %v248
    %254 = vmatpush.bf16.msra.mxu0 0
    %255 = vmatpush.bf16.msra.mxu0 0
    %256 = vmatpush.bf16.msra.mxu0 0
    %257 = vmatpush.bf16.msra.mxu0 0
    %258 = vmatpush.bf16.msra.mxu0 0
    %259 = vmatpush.bf16.msra.mxu0 0
    %260 = vmatpush.bf16.msra.mxu0 %v251
    %261 = vmatpush.bf16.msra.mxu0 %v250
    %262 = vmatmul.bf16.gmra.mxu0 %v122
    %v263 = vpop.f32.mrf.mxu0
    %v264 = vadd.f32 0.0, %v263
    %v265 = vpop.f32.mrf.mxu0
    %v266 = vadd.f32 0.0, %v265
    %267 = vmatmul.bf16.gmra.mxu0 %v125
    %v268 = vpop.f32.mrf.mxu0
    %v269 = vadd.f32 0.0, %v268
    %v270 = vpop.f32.mrf.mxu0
    %v271 = vadd.f32 0.0, %v270
    %272 = vdwg.mxu0
    %v273 = vrot.slane %v264, 3
    %v274 = vrot.slane %v269, 3
    %v275 = vrot.slane %v266, 3
    %v276 = vrot.slane %v271, 3
    %vm277 = vcmp.lt.s32.totalorder %v151, 5
    %v278 = vsel %vm277, %v273, %v275
    %v279 = vsel %vm277, %v274, %v276
    %v280 = vsel %vm277, %v275, %v273
    %v281 = vsel %vm277, %v276, %v274
    %v282 = vadd.f32 %v233, %v278
    %v283 = vadd.f32 %v234, %v280
    %v284 = vadd.f32 %v235, %v279
    %v285 = vadd.f32 %v236, %v281
    %s286 = scalar_lea.vmem [#allocation5], 64
    %v287 = vld [vmem:[%s286] sm:$0xf]
    %v288 = vld [vmem:[%s286 + $0x4] sm:$0xf]
    %v289 = vld [vmem:[%s286 + $0x8] sm:$0xf]
    %v290 = vld [vmem:[%s286 + $0xc] sm:$0xf]
    %v295 = vunpack.c.l.b16 %v287
    %v296 = vunpack.c.l.b16 %v288
    %v297 = vunpack.c.l.b16 %v289
    %v298 = vunpack.c.l.b16 %v290
    %v299 = vpack.c.b16 %v296, %v295
    %v300 = vpack.c.b16 %v298, %v297
    %303 = vmatpush.bf16.msra.mxu0 0
    %304 = vmatpush.bf16.msra.mxu0 0
    %305 = vmatpush.bf16.msra.mxu0 0
    %306 = vmatpush.bf16.msra.mxu0 0
    %307 = vmatpush.bf16.msra.mxu0 0
    %308 = vmatpush.bf16.msra.mxu0 0
    %309 = vmatpush.bf16.msra.mxu0 %v300
    %310 = vmatpush.bf16.msra.mxu0 %v299
    %311 = vmatmul.bf16.gmra.mxu0 %v122
    %v312 = vpop.f32.mrf.mxu0
    %v313 = vadd.f32 0.0, %v312
    %v314 = vpop.f32.mrf.mxu0
    %v315 = vadd.f32 0.0, %v314
    %316 = vmatmul.bf16.gmra.mxu0 %v125
    %v317 = vpop.f32.mrf.mxu0
    %v318 = vadd.f32 0.0, %v317
    %v319 = vpop.f32.mrf.mxu0
    %v320 = vadd.f32 0.0, %v319
    %321 = vdwg.mxu0
    %v322 = vrot.slane %v313, 4
    %v323 = vrot.slane %v318, 4
    %v324 = vrot.slane %v315, 4
    %v325 = vrot.slane %v320, 4
    %vm326 = vcmp.lt.s32.totalorder %v151, 4
    %v327 = vsel %vm326, %v322, %v324
    %v328 = vsel %vm326, %v323, %v325
    %v329 = vsel %vm326, %v324, %v322
    %v330 = vsel %vm326, %v325, %v323
    %v331 = vadd.f32 %v282, %v327
    %v332 = vadd.f32 %v283, %v329
    %v333 = vadd.f32 %v284, %v328
    %v334 = vadd.f32 %v285, %v330
    %v335 = vld [vmem:[#allocation7] sm:$0xff]
    %v336 = vld [vmem:[#allocation7 + $0x8] sm:$0xff]
    %v337 = vadd.f32 %v331, %v335
    %v338 = vadd.f32 %v332, %v336
    %v339 = vadd.f32 %v333, %v335
    %v340 = vadd.f32 %v334, %v336
    %v341 = vmax.f32 %v337, 0.0
    %v342 = vmax.f32 %v338, 0.0
    %v343 = vmax.f32 %v339, 0.0
    %v344 = vmax.f32 %v340, 0.0
    %v345 = vmax.f32 %v341, %v342
    %v346 = vrot.slane %v345, 4
    %v347 = vmax.f32 %v345, %v346
    %v348 = vrot.slane %v347, 2
    %v349 = vmax.f32 %v347, %v348
    %v350 = vrot.slane %v349, 1
    %v351 = vmax.f32 %v349, %v350
    %v352 = vmax.f32 %v343, %v344
    %v353 = vrot.slane %v352, 4
    %v354 = vmax.f32 %v352, %v353
    %v355 = vrot.slane %v354, 2
    %v356 = vmax.f32 %v354, %v355
    %v357 = vrot.slane %v356, 1
    %v358 = vmax.f32 %v356, %v357
    %v359 = vpack.c.bf16 %v351, %v351
    %v360 = vpack.c.bf16 %v358, %v358
    %v361 = vld [vmem:[#allocation8] sm:$0xf]
    %v362 = vld [vmem:[#allocation8 + $0x4] sm:$0xf]
    %v363 = vld [vmem:[#allocation8 + $0x8] sm:$0xf]
    %v364 = vld [vmem:[#allocation8 + $0xc] sm:$0xf]
    %v365 = vld [vmem:[#allocation8 + $0x10] sm:$0xf]
    %v366 = vld [vmem:[#allocation8 + $0x14] sm:$0xf]
    %v367 = vld [vmem:[#allocation8 + $0x18] sm:$0xf]
    %v368 = vld [vmem:[#allocation8 + $0x1c] sm:$0xf]
    %v369 = vld [vmem:[#allocation8 + $0x20] sm:$0xf]
    %v370 = vld [vmem:[#allocation8 + $0x24] sm:$0xf]
    %v371 = vld [vmem:[#allocation8 + $0x28] sm:$0xf]
    %v372 = vld [vmem:[#allocation8 + $0x2c] sm:$0xf]
    %v373 = vld [vmem:[#allocation8 + $0x30] sm:$0xf]
    %v374 = vld [vmem:[#allocation8 + $0x34] sm:$0xf]
    %v375 = vld [vmem:[#allocation8 + $0x38] sm:$0xf]
    %v376 = vld [vmem:[#allocation8 + $0x3c] sm:$0xf]
    %v377 = vld [vmem:[%s4] sm:$0x1]
    %v379 = vperm.slane %v377, 0
    %v383 = vunpack.c.l.b16 %v359
    %v384 = vunpack.c.l.b16 %v360
    %vm385 = vcmask 1041409
    %v386 = vsel %vm385, %v384, %v383
    %v387 = vpack.c.b16 %v386, %v386
    %v405 = vunpack.c.l.b16 %v361
    %v406 = vunpack.c.l.b16 %v362
    %v407 = vunpack.c.l.b16 %v363
    %v408 = vunpack.c.l.b16 %v364
    %v409 = vunpack.c.l.b16 %v365
    %v410 = vunpack.c.l.b16 %v366
    %v411 = vunpack.c.l.b16 %v367
    %v412 = vunpack.c.l.b16 %v368
    %v413 = vunpack.c.l.b16 %v369
    %v414 = vunpack.c.l.b16 %v370
    %v415 = vunpack.c.l.b16 %v371
    %v416 = vunpack.c.l.b16 %v372
    %v417 = vunpack.c.l.b16 %v373
    %v418 = vunpack.c.l.b16 %v374
    %v419 = vunpack.c.l.b16 %v375
    %v420 = vunpack.c.l.b16 %v376
    %v421 = vpack.c.b16 %v406, %v405
    %v422 = vpack.c.b16 %v408, %v407
    %v423 = vpack.c.b16 %v410, %v409
    %v424 = vpack.c.b16 %v412, %v411
    %v425 = vpack.c.b16 %v414, %v413
    %v426 = vpack.c.b16 %v416, %v415
    %v427 = vpack.c.b16 %v418, %v417
    %v428 = vpack.c.b16 %v420, %v419
    %437 = vmatpush.bf16.msra.mxu0 %v428
    %438 = vmatpush.bf16.msra.mxu0 %v427
    %439 = vmatpush.bf16.msra.mxu0 %v426
    %440 = vmatpush.bf16.msra.mxu0 %v425
    %441 = vmatpush.bf16.msra.mxu0 %v424
    %442 = vmatpush.bf16.msra.mxu0 %v423
    %443 = vmatpush.bf16.msra.mxu0 %v422
    %444 = vmatpush.bf16.msra.mxu0 %v421
    %445 = vmatmul.bf16.gmra.mxu0 %v387
    %v446 = vpop.f32.mrf.mxu0
    %v447 = vadd.f32 %v379, %v446
    %v448 = vpop.f32.mrf.mxu0
    %449 = vdwg.mxu0
    %450 = vst [vmem:[#allocation10] sm:$0x3] %v447
    // Predicated region
    $region38: #{tpu_custom_call.1} parent=1 // pred_check
      _
    $region39: #{tpu_custom_call.1} parent=1 // pred_check_branch
      %452 = sbr.rel (0) target = $region41
    $region40: #{tpu_custom_call.1} parent=1 // pred_region
      %454 = vsyncadd [#allocation4], 0
      %s456 = sshll.u32 [#allocation10], 4
      %s457 = int_to_ptr.vmem [resolvable:$true] %s456
      %s458 = sshll.u32 %s5, 4
      %s459 = int_to_ptr.hbm [resolvable:$true] %s458
      %461 = dma.vmem_to_hbm [thread:$0]  %s457, 32, %s459, [#allocation4]
    $region41: #{tpu_custom_call.1} parent=1 // pred_fallthru
      _
    // Predicated region
    $region42: #{tpu_custom_call.1} parent=1 // pred_check
      _
    $region43: #{tpu_custom_call.1} parent=1 // pred_check_branch
      %463 = sbr.rel (0) target = $region45
    $region44: #{tpu_custom_call.1} parent=1 // pred_region
      %465 = dma.done [#allocation4], 32
    $region45: #{tpu_custom_call.1} parent=1 // pred_fallthru
      _
    %466 = vsyncpa [#allocation3], 1
    %467 = vsyncpa [#allocation6], 1
    %468 = vsyncpa [#allocation9], 1
    %469 = vsyncpa [#allocation4], 1

</llo_original>
